<compile_context>
chip_gen: v7x
topology: tpu7x:2x2x1
jax: 0.10.0
libtpu: 0.0.40
codegen_flags: <defaults>
</compile_context>

<pallas_src>
import math
import functools

import jax
import jax.numpy as jnp
from jax.experimental import pallas as pl
from jax.experimental.pallas import tpu as pltpu


def _embedding_gather_kernel(ids_ref, lut_hbm, o_ref, row_buf, sem,
                             *, block_tokens: int, scale: float):
    """Gather `block_tokens` embedding rows from HBM, scale, and store.

    ids_ref  : SMEM int32[N_pad]            scalar-prefetched (clamped) token ids
    lut_hbm  : HBM  (vocab, d_model)        embedding table (memory_space=pl.ANY)
    o_ref    : VMEM (block_tokens, d_model) output block for this grid step
    row_buf  : VMEM (block_tokens, d_model) scratch gather buffer
    sem      : DMA semaphore array, shape (1,)
    """
    base = pl.program_id(0) * block_tokens

    # Issue all row-gather DMAs for this block back-to-back so many copies are
    # in flight at once (the gather is DMA-issue bound, not bandwidth bound).
    @pl.loop(0, block_tokens)
    def _issue(t):
        row = ids_ref[base + t]
        pltpu.make_async_copy(
            lut_hbm.at[pl.ds(row, 1), :],
            row_buf.at[pl.ds(t, 1), :],
            sem.at[0],
        ).start()

    # Wait for every issued copy with an identically-shaped descriptor
    # (balances the semaphore regardless of byte- vs completion-counting).
    @pl.loop(0, block_tokens)
    def _wait(t):
        row = ids_ref[base + t]
        pltpu.make_async_copy(
            lut_hbm.at[pl.ds(row, 1), :],
            row_buf.at[pl.ds(t, 1), :],
            sem.at[0],
        ).wait()

    # Fused sqrt(d_model) scale (free VPU work in a DMA-bound kernel).
    rows = row_buf[...].astype(jnp.float32)
    o_ref[...] = (rows * jnp.float32(scale)).astype(o_ref.dtype)


def embeddings_forward(token_ids: jnp.ndarray, lut: jnp.ndarray,
                       *, max_block_tokens: int = 256) -> jnp.ndarray:
    """Pallas equivalent of Embeddings.forward: lut[token_ids] * sqrt(d_model).

    token_ids: (B, S) integer token indices.
    lut:       (vocab, d_model) embedding table (the nn.Embedding weight).
    returns:   (B, S, d_model) in lut.dtype.
    """
    B, S = token_ids.shape
    vocab, d_model = lut.shape
    N = B * S
    scale = math.sqrt(d_model)

    # Clamp ids so an out-of-range token can never turn into an OOB HBM DMA.
    ids_flat = jnp.clip(token_ids.reshape(N).astype(jnp.int32), 0, vocab - 1)

    # Tokens per grid step: multiple of 8 (sublane-dense output blocks),
    # capped at max_block_tokens.
    tb = min(max_block_tokens, ((N + 7) // 8) * 8)
    nb = pl.cdiv(N, tb)
    n_pad = nb * tb
    if n_pad != N:
        # Pad with id 0 (valid after clamping); padded rows are sliced off below.
        ids_flat = jnp.pad(ids_flat, (0, n_pad - N))

    kernel = functools.partial(_embedding_gather_kernel,
                               block_tokens=tb, scale=scale)

    itemsize = jnp.dtype(lut.dtype).itemsize
    cost = pl.CostEstimate(
        flops=n_pad * d_model,
        transcendentals=0,
        bytes_accessed=2 * n_pad * d_model * itemsize + n_pad * 4,
    )

    out_flat = pl.pallas_call(
        kernel,
        out_shape=jax.ShapeDtypeStruct((n_pad, d_model), lut.dtype),
        grid_spec=pltpu.PrefetchScalarGridSpec(
            num_scalar_prefetch=1,          # token ids -> SMEM
            grid=(nb,),                     # one block of TB tokens per step
            in_specs=[
                # Embedding table stays in HBM; gathered via manual DMAs.
                pl.BlockSpec(memory_space=pl.ANY),
            ],
            out_specs=pl.BlockSpec((tb, d_model), lambda i, ids: (i, 0)),
            scratch_shapes=[
                pltpu.VMEM((tb, d_model), lut.dtype),   # gather buffer
                pltpu.SemaphoreType.DMA((1,)),          # gather completion sem
            ],
        ),
        compiler_params=pltpu.CompilerParams(
            # Blocks are independent & self-contained -> safe to shard across
            # the two TensorCores on v7x; neutral on single-TC v5e/v6e.
            dimension_semantics=("parallel",),
        ),
        cost_estimate=cost,
    )(ids_flat, lut)

    return out_flat[:N].reshape(B, S, d_model)


if __name__ == "__main__":
    key = jax.random.PRNGKey(0)
    k1, k2, k3, k4 = jax.random.split(key, 4)

    # Case 1: small, module-consistent shapes (batch=2, seq=8, d_model=128).
    B, S, vocab, d_model = 2, 8, 97, 128
    token_ids = jax.random.randint(k1, (B, S), 0, vocab, dtype=jnp.int32)
    lut = jax.random.normal(k2, (vocab, d_model), dtype=jnp.float32)

    out = jax.block_until_ready(embeddings_forward(token_ids, lut))
    ref = lut[token_ids] * math.sqrt(d_model)
    assert out.shape == (B, S, d_model)
    assert jnp.allclose(out, ref, atol=1e-5, rtol=1e-5), "case 1 mismatch"

    # Case 2: multi-block grid (exercises batching, padding tail, other d_model).
    B2, S2, vocab2, d2 = 4, 200, 311, 256
    token_ids2 = jax.random.randint(k3, (B2, S2), 0, vocab2, dtype=jnp.int32)
    lut2 = jax.random.normal(k4, (vocab2, d2), dtype=jnp.float32)

    out2 = jax.block_until_ready(embeddings_forward(token_ids2, lut2))
    ref2 = lut2[token_ids2] * math.sqrt(d2)
    assert out2.shape == (B2, S2, d2)
    assert jnp.allclose(out2, ref2, atol=1e-5, rtol=1e-5), "case 2 mismatch"

    print("KERNEL_OK")
</pallas_src>

<mosaic_0001>
module attributes {stable_mosaic.version = 11 : i64} {
  func.func @_embedding_gather_kernel(%arg0: i32, %arg1: memref<16xi32, #tpu.memory_space<smem>>, %arg2: memref<97x128xf32, #tpu.memory_space<any>>, %arg3: memref<16x128xf32, #tpu.memory_space<vmem>>, %arg4: memref<16x128xf32, #tpu.memory_space<vmem>>, %arg5: memref<1x!tpu.dma_semaphore, #tpu.memory_space<semaphore_mem>>) attributes {dimension_semantics = [#tpu.dimension_semantics<parallel>], iteration_bounds = array<i64: 1>, scalar_prefetch = 1 : i64, scratch_operands = 2 : i64, tpu.core_type = #tpu.core_type<tc>, window_params = [{}, {transform_indices = @transform_1, window_bounds = array<i64: 16, 128>}]} {
    %c16_i32 = arith.constant 16 : i32
    %0 = arith.muli %arg0, %c16_i32 : i32
    %c0_i32 = arith.constant 0 : i32
    %c16_i32_0 = arith.constant 16 : i32
    %1 = arith.addi %c0_i32, %c16_i32_0 : i32
    %c1_i32 = arith.constant 1 : i32
    scf.for %arg6 = %c0_i32 to %1 step %c1_i32  : i32 {
      %c1_i32_9 = arith.constant 1 : i32
      %7 = arith.muli %arg6, %c1_i32_9 : i32
      %c0_i32_10 = arith.constant 0 : i32
      %8 = arith.addi %c0_i32_10, %7 : i32
      %9 = arith.addi %0, %8 : i32
      %10 = arith.index_cast %9 : i32 to index
      %11 = memref.load %arg1[%10] : memref<16xi32, #tpu.memory_space<smem>>
      %c0_i32_11 = arith.constant 0 : i32
      %c0_i32_12 = arith.constant 0 : i32
      %12 = tpu.memref_slice %arg2[%11, %c0_i32_12] : memref<97x128xf32, #tpu.memory_space<any>> -> memref<1x128xf32, #tpu.memory_space<any>>
      %c0_i32_13 = arith.constant 0 : i32
      %13 = tpu.memref_slice %arg4[%8, %c0_i32_13] : memref<16x128xf32, #tpu.memory_space<vmem>> -> memref<1x128xf32, #tpu.memory_space<vmem>>
      %14 = tpu.memref_slice %arg5[%c0_i32_11] : memref<1x!tpu.dma_semaphore, #tpu.memory_space<semaphore_mem>> -> memref<1x!tpu.dma_semaphore, #tpu.memory_space<semaphore_mem>>
      %15 = tpu.memref_squeeze %14 : memref<1x!tpu.dma_semaphore, #tpu.memory_space<semaphore_mem>> -> memref<!tpu.dma_semaphore, #tpu.memory_space<semaphore_mem>>
      tpu.enqueue_dma source(%12 : memref<1x128xf32, #tpu.memory_space<any>>) target(%13 : memref<1x128xf32, #tpu.memory_space<vmem>>) target_semaphore(%15 : memref<!tpu.dma_semaphore, #tpu.memory_space<semaphore_mem>>)
    }
    %c16_i32_1 = arith.constant 16 : i32
    %c0_i32_2 = arith.constant 0 : i32
    %c16_i32_3 = arith.constant 16 : i32
    %2 = arith.addi %c0_i32_2, %c16_i32_3 : i32
    %c1_i32_4 = arith.constant 1 : i32
    scf.for %arg6 = %c0_i32_2 to %2 step %c1_i32_4  : i32 {
      %c1_i32_9 = arith.constant 1 : i32
      %7 = arith.muli %arg6, %c1_i32_9 : i32
      %c0_i32_10 = arith.constant 0 : i32
      %8 = arith.addi %c0_i32_10, %7 : i32
      %9 = arith.addi %0, %8 : i32
      %10 = arith.index_cast %9 : i32 to index
      %11 = memref.load %arg1[%10] : memref<16xi32, #tpu.memory_space<smem>>
      %c0_i32_11 = arith.constant 0 : i32
      %c0_i32_12 = arith.constant 0 : i32
      %12 = tpu.memref_slice %arg2[%11, %c0_i32_12] : memref<97x128xf32, #tpu.memory_space<any>> -> memref<1x128xf32, #tpu.memory_space<any>>
      %c0_i32_13 = arith.constant 0 : i32
      %13 = tpu.memref_slice %arg4[%8, %c0_i32_13] : memref<16x128xf32, #tpu.memory_space<vmem>> -> memref<1x128xf32, #tpu.memory_space<vmem>>
      %14 = tpu.memref_slice %arg5[%c0_i32_11] : memref<1x!tpu.dma_semaphore, #tpu.memory_space<semaphore_mem>> -> memref<1x!tpu.dma_semaphore, #tpu.memory_space<semaphore_mem>>
      %15 = tpu.memref_squeeze %14 : memref<1x!tpu.dma_semaphore, #tpu.memory_space<semaphore_mem>> -> memref<!tpu.dma_semaphore, #tpu.memory_space<semaphore_mem>>
      tpu.wait_dma2 semaphore(%15 : memref<!tpu.dma_semaphore, #tpu.memory_space<semaphore_mem>>) src(%12 : memref<1x128xf32, #tpu.memory_space<any>>) dst(%13 : memref<1x128xf32, #tpu.memory_space<vmem>>)
    }
    %c16_i32_5 = arith.constant 16 : i32
    %c0 = arith.constant 0 : index
    %c0_6 = arith.constant 0 : index
    %3 = vector.load %arg4[%c0, %c0_6] : memref<16x128xf32, #tpu.memory_space<vmem>>, vector<16x128xf32>
    %cst = arith.constant 11.3137083 : f32
    %4 = vector.broadcast %cst : f32 to vector<16x128xf32>
    %5 = arith.mulf %3, %4 : vector<16x128xf32>
    %c0_7 = arith.constant 0 : index
    %c0_8 = arith.constant 0 : index
    %6 = vector.load %arg3[%c0_7, %c0_8] : memref<16x128xf32, #tpu.memory_space<vmem>>, vector<16x128xf32>
    tpu.vector_store %arg3[%c0_7, %c0_8], %5 {strides = array<i32>} : memref<16x128xf32, #tpu.memory_space<vmem>>, vector<16x128xf32>,
    return
  }
  func.func @transform_1(%arg0: i32, %arg1: memref<16xi32, #tpu.memory_space<smem>>) -> (i32, i32) {
    %c0_i32 = arith.constant 0 : i32
    %c0_i32_0 = arith.constant 0 : i32
    return %arg0, %c0_i32 : i32, i32
  }
}

</mosaic_0001>

<llo_original>
// kernel: tpu_custom_call.1
$region0: #{tpu_custom_call.1}
  #allocation0 [shape = 'u32[]', space=smem, size = 0x4, offset = 0x4, fixed_abs, tag = 'smem constant byte address 0x4 - core index']
  #allocation1 [shape = 'u32[144,128]{1,0:T(1,128)}', space=vmem, size = 0x12000, scoped, tag = 'internal scratch']
  #allocation2 [shape = 'f32[16,128]{1,0:T(8,128)}', space=vmem, size = 0x2000, scoped, tag = 'scratch operand']
  #allocation3 [shape = 's32[1]{0}', space=sflag, size = 0x4, scoped, tag = 'scratch operand']
  #allocation4 [shape = 's32[1]{0}', space=sflag, size = 0x4, scoped, tag = 'scoped memory for tpu_custom_call.1']
  #allocation5 [shape = 'u8[512]{0}', space=smem, size = 0x200, scoped, tag = 'prefetched SMEM operand 0']
  #allocation8 [shape = 's32[]', space=sflag, size = 0x4, offset = 0, fixed_abs, tag = 'sflag constant byte address 0x0 - dummy sync flag']
  #allocation9 [shape = 's32[]', space=sflag, size = 0x4, offset = 0, fixed_abs, tag = 'sflag constant byte address 0x0 - dummy sync flag']
  #allocation10 [shape = 'u32[]', space=smem, size = 0x4, offset = 0x44, fixed_abs, tag = 'smem constant byte address 0x44 - assertion arg 0']
  #allocation11 [shape = 'u32[]', space=smem, size = 0x4, offset = 0x48, fixed_abs, tag = 'smem constant byte address 0x48 - assertion arg 1']
  %s0 = inlined_call_operand.hbm [shape: s32[16], index: 0, kind: input, shape index: {}]
  %s1 = inlined_call_operand.hbm [shape: f32[97,128], index: 1, kind: input, shape index: {}]
  %s2 = inlined_call_operand.hbm [shape: f32[16,128], index: 2, kind: output, shape index: {}]
  %s3 = sld [smem:[#allocation0]]
  $region28: #{tpu_custom_call.1} parent=0
    _
  %s5 = ssub.s32 1, %s3
  %s6 = scalar_select 0, %s5, %s3
  %8 = dma.hbm_to_smem %s0, 16, [#allocation5], [#allocation4]
  %9 = dma.done [#allocation4], 16
  %10 = sfence
  $region1: #{tpu_custom_call.1} parent=0
    #allocation6 [shape = 'u8[8192]{0}', space=vmem, size = 0x2000, scoped, tag = 'output window, operand 0, single buffered']
    #allocation7 [shape = 's32[1]{0}', space=sflag, size = 0x4, scoped, tag = 'scoped memory for tpu_custom_call.1']
    %11 = vsyncpa [#allocation7], 0
    %s12 = smul.u32 0, 16
    loop: start=0, step=1, limit=16
    $region2: #{tpu_custom_call.1} parent=1 // loop_pre_header
      _
    $region3: #{tpu_custom_call.1} parent=1 // loop_header
      %s14 = sphi 0, %s18
      %p15 = scmp.ge.s32.totalorder %s14, 16
    $region4: #{tpu_custom_call.1} parent=1 // loop_header_branch
      %17 = sbr.rel (%p15) target = $region8
    $region5: #{tpu_custom_call.1} parent=1 // loop_body
      %s19 = sadd.s32 %s12, %s14
      %s20 = sld [smem:[#allocation5 + %s19]]
      %s21 = smul.addr %s20, 16
      %s22 = scalar_lea.hbm %s1, %s21
      %s23 = scalar_lea.vmem [#allocation2], %s14
      // Predicated region
      $region9: #{tpu_custom_call.1} parent=5 // pred_check
        _
      $region10: #{tpu_custom_call.1} parent=5 // pred_check_branch
        %25 = sbr.rel target = $region12
      $region11: #{tpu_custom_call.1} parent=5 // pred_region
        %26 = sst [smem:[#allocation10]] [#allocation9]
        %27 = sst [smem:[#allocation11]] [#allocation8]
      $region12: #{tpu_custom_call.1} parent=5 // pred_fallthru
        _
      %29 = shalt.err (0)
      %s31 = sshll.u32 %s23, 4
      %s32 = int_to_ptr.vmem [resolvable:$true] %s31
      %34 = dma.hbm_to_vmem [thread:$0]  %s22, 16, %s32, [#allocation3]
    $region6: #{tpu_custom_call.1} parent=1 // loop_footer
      %s18 = sadd.s32 1, %s14
    $region7: #{tpu_custom_call.1} parent=1 // loop_footer_branch
      %13 = sbr.rel target = $region3
    $region8: #{tpu_custom_call.1} parent=1 // loop_exit
      _
    loop: start=0, step=1, limit=16
    $region13: #{tpu_custom_call.1} parent=1 // loop_pre_header
      _
    $region14: #{tpu_custom_call.1} parent=1 // loop_header
      %s36 = sphi 0, %s40
      %p37 = scmp.ge.s32.totalorder %s36, 16
    $region15: #{tpu_custom_call.1} parent=1 // loop_header_branch
      %39 = sbr.rel (%p37) target = $region19
    $region16: #{tpu_custom_call.1} parent=1 // loop_body
      %s41 = sadd.s32 %s12, %s36
      %s42 = sld [smem:[#allocation5 + %s41]]
      %s43 = smul.u32 1, 1
      %s44 = sshll.u32 %s43, 4
      %45 = dma.done [#allocation3], %s44
    $region17: #{tpu_custom_call.1} parent=1 // loop_footer
      %s40 = sadd.s32 1, %s36
    $region18: #{tpu_custom_call.1} parent=1 // loop_footer_branch
      %35 = sbr.rel target = $region14
    $region19: #{tpu_custom_call.1} parent=1 // loop_exit
      _
    %v46 = vld [vmem:[#allocation2] sm:$0xff]
    %v47 = vld [vmem:[#allocation2 + $0x8] sm:$0xff]
    %v48 = vmul.f32 %v46, 11.313708
    %v49 = vmul.f32 %v47, 11.313708
    %50 = vst [vmem:[#allocation6] sm:$0xff] %v48
    %51 = vst [vmem:[#allocation6 + $0x8] sm:$0xff] %v49
    // Predicated region
    $region20: #{tpu_custom_call.1} parent=1 // pred_check
      _
    $region21: #{tpu_custom_call.1} parent=1 // pred_check_branch
      %53 = sbr.rel (0) target = $region23
    $region22: #{tpu_custom_call.1} parent=1 // pred_region
      %s55 = ssub.s32 256, 256
      %56 = vsyncadd [#allocation7], %s55
      %s57 = sshll.u32 [#allocation6], 4
      %s58 = int_to_ptr.vmem [resolvable:$true] %s57
      %63 = dma.vmem_to_hbm [thread:$0]  %s58, 256, %s2, [#allocation7], 128, 128, 8
    $region23: #{tpu_custom_call.1} parent=1 // pred_fallthru
      _
    // Predicated region
    $region24: #{tpu_custom_call.1} parent=1 // pred_check
      _
    $region25: #{tpu_custom_call.1} parent=1 // pred_check_branch
      %65 = sbr.rel (0) target = $region27
    $region26: #{tpu_custom_call.1} parent=1 // pred_region
      %66 = dma.done [#allocation7], 256
    $region27: #{tpu_custom_call.1} parent=1 // pred_fallthru
      _
    %67 = vsyncpa [#allocation7], 1
  %68 = vsyncmov [#allocation3]
  %s69 = vpop.sfrf %68
  %p70 = scmp.eq.s32.totalorder %s69, 0
  %p71 = pneg %p70
  %73 = shalt.err (%p71)

</llo_original>
